<compile_context>
chip_gen: v7x
topology: tpu7x:2x2x1
jax: 0.10.0
libtpu: 0.0.40
codegen_flags: <defaults>
</compile_context>

<pallas_src>
import math

import jax
import jax.numpy as jnp
from jax.experimental import pallas as pl
from jax.experimental.pallas import tpu as pltpu

_LANE = 128
_LANES_MAX = 2048                        # widest lane-dense last dim we target
_TARGET_BLOCK_BYTES = 4 * 1024 * 1024    # ~4 MiB per block: safe on v5e/v6e/v7x


def _guided_relu_kernel(x_ref, o_ref):
    x = x_ref[...]
    # ReLU forward: keep x where strictly positive, else 0.
    o_ref[...] = jnp.where(x > 0, x, jnp.zeros_like(x))


def _sublane_pack(dtype) -> int:
    """Native sublane packing (vreg rows) for the dtype."""
    return {4: 8, 2: 16, 1: 32}.get(jnp.dtype(dtype).itemsize, 8)


def _largest_divisor(n: int, multiple_of: int, cap: int):
    """Largest d with d | n, d % multiple_of == 0 and d <= cap (None if none)."""
    if cap < multiple_of:
        return None
    best = None
    i = 1
    while i * i <= n:
        if n % i == 0:
            for d in (i, n // i):
                if d <= cap and d % multiple_of == 0 and (best is None or d > best):
                    best = d
        i += 1
    return best


def _run_2d(x2d, tile_rows, *, donate=False):
    rows, cols = x2d.shape
    dtype = x2d.dtype
    tile_bytes = tile_rows * cols * jnp.dtype(dtype).itemsize
    # Double-buffered input + output blocks, plus headroom.
    vmem_limit = int(min(max(4 * tile_bytes + (2 << 20), 16 << 20), 40 << 20))
    return pl.pallas_call(
        _guided_relu_kernel,
        out_shape=jax.ShapeDtypeStruct((rows, cols), dtype),
        grid_spec=pltpu.PrefetchScalarGridSpec(
            num_scalar_prefetch=0,
            grid=(rows // tile_rows,),
            in_specs=[pl.BlockSpec((tile_rows, cols), lambda i: (i, 0))],
            out_specs=pl.BlockSpec((tile_rows, cols), lambda i: (i, 0)),
        ),
        compiler_params=pltpu.CompilerParams(
            dimension_semantics=("parallel",),
            vmem_limit_bytes=vmem_limit,
        ),
        input_output_aliases=({0: 0} if donate else {}),
    )(x2d)


def guided_backprop_relu_forward(
    x: jax.Array,
    *,
    target_block_bytes: int = _TARGET_BLOCK_BYTES,
    donate_input: bool = False,
) -> jax.Array:
    """Forward of GuidedBackpropReLU: elementwise x * (x > 0) == ReLU(x).

    Any shape / dtype. `donate_input=True` aliases output onto the input HBM
    buffer (only beneficial if the caller actually donates x).
    """
    orig_shape = x.shape
    dtype = x.dtype
    total = math.prod(orig_shape) if orig_shape else 1
    if total == 0:
        return x

    itemsize = jnp.dtype(dtype).itemsize
    sublane = _sublane_pack(dtype)

    # ---------- Fast path: zero-copy lane-dense reshape (no pad / slice) ----
    if total % _LANE == 0:
        cols = _LANE
        while cols * 2 <= _LANES_MAX and total % (cols * 2) == 0:
            cols *= 2
        rows = total // cols
        row_cap = max(sublane, target_block_bytes // (cols * itemsize))
        tile_rows = _largest_divisor(rows, sublane, row_cap)
        if tile_rows is None and rows <= row_cap:
            # Full-extent rows block is always legal (block dim == array dim).
            tile_rows = rows
        if tile_rows is not None:
            out2d = _run_2d(x.reshape(rows, cols), tile_rows, donate=donate_input)
            return out2d.reshape(orig_shape)

    # ---------- Fallback: pad up to one tile, then slice back ---------------
    cols = _LANES_MAX if total >= _LANES_MAX * sublane else _LANE
    rows = -(-total // cols)
    row_cap = max(sublane, target_block_bytes // (cols * itemsize))
    tile_rows = max(sublane, (row_cap // sublane) * sublane)
    tile_rows = min(tile_rows, -(-rows // sublane) * sublane)
    rows_padded = -(-rows // tile_rows) * tile_rows
    padded_total = rows_padded * cols

    x_flat = jnp.ravel(x)
    x_flat = jnp.pad(x_flat, (0, padded_total - total))
    out2d = _run_2d(x_flat.reshape(rows_padded, cols), tile_rows)
    return out2d.reshape(-1)[:total].reshape(orig_shape)


if __name__ == "__main__":
    key = jax.random.PRNGKey(0)
    k1, k2, k3 = jax.random.split(key, 3)

    # NCHW conv-activation shaped input (zero-copy fast path).
    x = jax.random.normal(k1, (2, 4, 16, 16), dtype=jnp.float32)
    out = jax.block_until_ready(guided_backprop_relu_forward(x))
    ref = x * (x > 0).astype(x.dtype)
    assert out.shape == x.shape and out.dtype == x.dtype
    assert jnp.allclose(out, ref), "f32 fast-path mismatch vs reference"

    # Ragged size (exercises the padded fallback path).
    y = jax.random.normal(k2, (3, 5, 7), dtype=jnp.float32)
    out_y = jax.block_until_ready(guided_backprop_relu_forward(y))
    ref_y = y * (y > 0).astype(y.dtype)
    assert out_y.shape == y.shape
    assert jnp.allclose(out_y, ref_y), "ragged fallback mismatch vs reference"

    # bf16 input (exercises dtype-dependent sublane packing).
    z = jax.random.normal(k3, (2, 4, 16, 16), dtype=jnp.bfloat16)
    out_z = jax.block_until_ready(guided_backprop_relu_forward(z))
    ref_z = z * (z > 0).astype(z.dtype)
    assert out_z.dtype == z.dtype
    assert jnp.allclose(out_z.astype(jnp.float32), ref_z.astype(jnp.float32)), \
        "bf16 mismatch vs reference"

    print("KERNEL_OK")
</pallas_src>

<mosaic_0001>
module attributes {stable_mosaic.version = 11 : i64} {
  func.func @_guided_relu_kernel(%arg0: i32, %arg1: memref<1x2048xf32, #tpu.memory_space<vmem>>, %arg2: memref<1x2048xf32, #tpu.memory_space<vmem>>) attributes {dimension_semantics = [#tpu.dimension_semantics<parallel>], iteration_bounds = array<i64: 1>, scalar_prefetch = 0 : i64, scratch_operands = 0 : i64, tpu.core_type = #tpu.core_type<tc>, window_params = [{transform_indices = @transform_0, window_bounds = array<i64: 1, 2048>}, {transform_indices = @transform_1, window_bounds = array<i64: 1, 2048>}]} {
    %c0 = arith.constant 0 : index
    %c0_0 = arith.constant 0 : index
    %0 = vector.load %arg1[%c0, %c0_0] : memref<1x2048xf32, #tpu.memory_space<vmem>>, vector<1x2048xf32>
    %cst = arith.constant 0.000000e+00 : f32
    %1 = vector.broadcast %cst : f32 to vector<1x2048xf32>
    %2 = arith.cmpf ogt, %0, %1 : vector<1x2048xf32>
    %cst_1 = arith.constant 0.000000e+00 : f32
    %3 = vector.broadcast %cst_1 : f32 to vector<1x2048xf32>
    %4 = arith.select %2, %0, %3 : vector<1x2048xi1>, vector<1x2048xf32>
    %c0_2 = arith.constant 0 : index
    %c0_3 = arith.constant 0 : index
    %5 = vector.load %arg2[%c0_2, %c0_3] : memref<1x2048xf32, #tpu.memory_space<vmem>>, vector<1x2048xf32>
    tpu.vector_store %arg2[%c0_2, %c0_3], %4 {strides = array<i32>} : memref<1x2048xf32, #tpu.memory_space<vmem>>, vector<1x2048xf32>,
    return
  }
  func.func @transform_0(%arg0: i32) -> (i32, i32) {
    %c0_i32 = arith.constant 0 : i32
    %c0_i32_0 = arith.constant 0 : i32
    return %arg0, %c0_i32 : i32, i32
  }
  func.func @transform_1(%arg0: i32) -> (i32, i32) {
    %c0_i32 = arith.constant 0 : i32
    %c0_i32_0 = arith.constant 0 : i32
    return %arg0, %c0_i32 : i32, i32
  }
}

</mosaic_0001>

<llo_original>
// kernel: tpu_custom_call.1
$region0: #{tpu_custom_call.1}
  #allocation0 [shape = 'u32[]', space=smem, size = 0x4, offset = 0x4, fixed_abs, tag = 'smem constant byte address 0x4 - core index']
  #allocation1 [shape = 'u32[144,128]{1,0:T(1,128)}', space=vmem, size = 0x12000, scoped, tag = 'internal scratch']
  %s0 = inlined_call_operand.hbm [shape: f32[1,2048], index: 0, kind: input, shape index: {}]
  %s1 = inlined_call_operand.hbm [shape: f32[1,2048], index: 1, kind: output, shape index: {}]
  %s2 = sld [smem:[#allocation0]]
  $region18: #{tpu_custom_call.1} parent=0
    _
  %s4 = ssub.s32 1, %s2
  %s5 = scalar_select 0, %s4, %s2
  $region1: #{tpu_custom_call.1} parent=0
    #allocation2 [shape = 'u8[8192]{0}', space=vmem, size = 0x2000, scoped, tag = 'input window, operand 0, single buffered']
    #allocation3 [shape = 's32[1]{0}', space=sflag, size = 0x4, scoped, tag = 'scoped memory for tpu_custom_call.1']
    #allocation4 [shape = 's32[1]{0}', space=sflag, size = 0x4, scoped, tag = 'scoped memory for tpu_custom_call.1']
    #allocation5 [shape = 'u8[8192]{0}', space=vmem, size = 0x2000, scoped, tag = 'output window, operand 0, single buffered']
    %6 = vsyncpa [#allocation3], 0
    %7 = vsyncpa [#allocation4], 0
    // Predicated region
    $region2: #{tpu_custom_call.1} parent=1 // pred_check
      _
    $region3: #{tpu_custom_call.1} parent=1 // pred_check_branch
      %9 = sbr.rel (0) target = $region5
    $region4: #{tpu_custom_call.1} parent=1 // pred_region
      %s11 = ssub.s32 256, 256
      %12 = vsyncadd [#allocation3], %s11
      %s14 = sshll.u32 [#allocation2], 4
      %s15 = int_to_ptr.vmem [resolvable:$true] %s14
      %17 = dma.hbm_to_vmem [thread:$0]  %s0, 256, %s15, [#allocation3]
    $region5: #{tpu_custom_call.1} parent=1 // pred_fallthru
      _
    // Predicated region
    $region6: #{tpu_custom_call.1} parent=1 // pred_check
      _
    $region7: #{tpu_custom_call.1} parent=1 // pred_check_branch
      %19 = sbr.rel (0) target = $region9
    $region8: #{tpu_custom_call.1} parent=1 // pred_region
      %20 = dma.done [#allocation3], 256
    $region9: #{tpu_custom_call.1} parent=1 // pred_fallthru
      _
    %v21 = vld [vmem:[#allocation2] sm:$0xff]
    %v22 = vld [vmem:[#allocation2 + $0x8] sm:$0xff]
    %vm23 = vcmp.gt.f32.partialorder %v21, 0.0
    %vm24 = vcmp.gt.f32.partialorder %v22, 0.0
    %v25 = vsel %vm23, %v21, 0.0
    %v26 = vsel %vm24, %v22, 0.0
    %27 = vst [vmem:[#allocation5] sm:$0xff] %v25
    %28 = vst [vmem:[#allocation5 + $0x8] sm:$0xff] %v26
    // Predicated region
    $region10: #{tpu_custom_call.1} parent=1 // pred_check
      _
    $region11: #{tpu_custom_call.1} parent=1 // pred_check_branch
      %30 = sbr.rel (0) target = $region13
    $region12: #{tpu_custom_call.1} parent=1 // pred_region
      %s32 = ssub.s32 256, 256
      %33 = vsyncadd [#allocation4], %s32
      %s35 = sshll.u32 [#allocation5], 4
      %s36 = int_to_ptr.vmem [resolvable:$true] %s35
      %38 = dma.vmem_to_hbm [thread:$0]  %s36, 256, %s1, [#allocation4]
    $region13: #{tpu_custom_call.1} parent=1 // pred_fallthru
      _
    // Predicated region
    $region14: #{tpu_custom_call.1} parent=1 // pred_check
      _
    $region15: #{tpu_custom_call.1} parent=1 // pred_check_branch
      %40 = sbr.rel (0) target = $region17
    $region16: #{tpu_custom_call.1} parent=1 // pred_region
      %41 = dma.done [#allocation4], 256
    $region17: #{tpu_custom_call.1} parent=1 // pred_fallthru
      _
    %42 = vsyncpa [#allocation3], 1
    %43 = vsyncpa [#allocation4], 1

</llo_original>
